<compile_context>
chip_gen: v5e
topology: v5e:2x2
jax: 0.10.0
libtpu: 0.0.40
codegen_flags: <defaults>
</compile_context>

<pallas_src>
import jax
import jax.numpy as jnp
import numpy as np
from jax.experimental import pallas as pl
from jax.experimental.pallas import tpu as pltpu

IN_FEATURES = 1024   # K
OUT_FEATURES = 512   # N


def _round_up(x, m):
    return ((x + m - 1) // m) * m


def rae_kernel(a_ref, b_ref, w_ref, bias_ref, o_ref):
    """One (m, n) tile: tanh(a_tile @ W[:, n] + bias[n]) and same for b_tile.

    a_ref, b_ref: (tm, K)  float32 activation tiles (a-half / b-half)
    w_ref:        (K, tn)  bfloat16 weight column-tile (resident across m)
    bias_ref:     (1, tn)  float32 bias column-tile
    o_ref:        (2, tm, tn) float32; o_ref[0] = a rows, o_ref[1] = b rows
    """
    w = w_ref[...]                               # bf16 (K, tn)
    bias = bias_ref[...]                         # f32 (1, tn), broadcasts

    # Cast activations on the VPU just before the MXU call (avoids an extra
    # XLA pass over HBM and keeps the MXU on its native bf16 path).
    a_bf = a_ref[...].astype(jnp.bfloat16)
    b_bf = b_ref[...].astype(jnp.bfloat16)

    ea = jnp.dot(a_bf, w, preferred_element_type=jnp.float32)
    eb = jnp.dot(b_bf, w, preferred_element_type=jnp.float32)

    # f32 epilogue (bias add + tanh); tanh goes to the EUP slot.
    o_ref[0, :, :] = jnp.tanh(ea + bias).astype(o_ref.dtype)
    o_ref[1, :, :] = jnp.tanh(eb + bias).astype(o_ref.dtype)


def rae_cell_forward(a, b, w_bf16, bias, *, tm_cap=512, tn=256):
    """Pallas implementation of RAECell.forward(a, b).

    a, b:    [B, 1024] float32
    w_bf16:  [1024, 512] bfloat16  -- Linear weight pre-transposed & pre-cast
                                      ONCE at setup (PyTorch stores [512,1024])
    bias:    [512] float32
    returns: [2B, 512] float32 (rows of a first, then rows of b)
    """
    B = a.shape[0]
    K = IN_FEATURES
    N = OUT_FEATURES
    assert a.shape == (B, K) and b.shape == (B, K)
    assert w_bf16.shape == (K, N) and w_bf16.dtype == jnp.bfloat16
    assert bias.shape == (N,)
    assert N % tn == 0

    # Batch-adaptive m-tile: multiple of 8 (sublane), capped at tm_cap.
    tm = max(8, min(tm_cap, _round_up(B, 8)))
    Bp = _round_up(B, tm)
    if Bp != B:
        pad = ((0, Bp - B), (0, 0))
        a = jnp.pad(a, pad)
        b = jnp.pad(b, pad)

    bias2d = bias.reshape(1, N)

    # Grid: m-tiles x N column-tiles, both parallel (v7x: 2 TCs share work
    # even when the m grid is size 1).  N iterates fastest, so the a/b block
    # index is unchanged across consecutive j steps and is not re-DMA'd.
    grid = (Bp // tm, N // tn)

    out = pl.pallas_call(
        rae_kernel,
        out_shape=jax.ShapeDtypeStruct((2, Bp, N), jnp.float32),
        grid_spec=pltpu.PrefetchScalarGridSpec(
            num_scalar_prefetch=0,
            grid=grid,
            in_specs=[
                pl.BlockSpec((tm, K), lambda i, j: (i, 0)),   # a m-tile
                pl.BlockSpec((tm, K), lambda i, j: (i, 0)),   # b m-tile
                pl.BlockSpec((K, tn), lambda i, j: (0, j)),   # bf16 weight col
                pl.BlockSpec((1, tn), lambda i, j: (0, j)),   # bias col
            ],
            out_specs=pl.BlockSpec((2, tm, tn), lambda i, j: (0, i, j)),
        ),
        compiler_params=pltpu.CompilerParams(
            dimension_semantics=("parallel", "parallel"),
            # Explicit limit so the ~11 MiB tm=512 footprint is accepted on
            # v5e (16 MiB default scoped VMEM); 32 MiB is safe on v6e/v7x too.
            vmem_limit_bytes=32 * 1024 * 1024,
        ),
    )(a, b, w_bf16, bias2d)

    # (2, Bp, N) -> drop padding rows -> (2B, N); a's rows first, then b's,
    # matching torch.cat((a, b)) ordering. Row-major reshape is free.
    out = out[:, :B, :].reshape(2 * B, N)
    return out


if __name__ == "__main__":
    key = jax.random.PRNGKey(0)
    k_a, k_b, k_w, k_bias = jax.random.split(key, 4)

    # Small batch; feature dims are fixed by the module (Linear(1024, 512)).
    B = 4
    a = jax.random.normal(k_a, (B, IN_FEATURES), dtype=jnp.float32)
    b = jax.random.normal(k_b, (B, IN_FEATURES), dtype=jnp.float32)

    # Deterministic init mimicking nn.Linear default (U[-1/sqrt(in), 1/sqrt(in)]).
    bound = 1.0 / np.sqrt(IN_FEATURES)
    weight = jax.random.uniform(
        k_w, (OUT_FEATURES, IN_FEATURES), dtype=jnp.float32,
        minval=-bound, maxval=bound)
    bias = jax.random.uniform(
        k_bias, (OUT_FEATURES,), dtype=jnp.float32,
        minval=-bound, maxval=bound)

    # Pre-transpose and pre-cast ONCE at parameter-setup time (not hot path):
    # halves the dominant weight HBM read and feeds the MXU its native bf16.
    w_bf16 = jnp.asarray(weight.T).astype(jnp.bfloat16)   # [1024, 512] bf16

    out = rae_cell_forward(a, b, w_bf16, bias)
    out = jax.block_until_ready(out)

    # Reference (plain JAX, full f32) check of the original module semantics.
    # Tolerance relaxed because the kernel's matmul runs in bf16 (f32 accum).
    ab = jnp.concatenate((a, b), axis=0)
    ref = jnp.tanh(ab @ weight.T + bias)
    np.testing.assert_allclose(np.asarray(out), np.asarray(ref),
                               rtol=2e-2, atol=2e-2)

    print("KERNEL_OK")
</pallas_src>

<mosaic_0001>
module attributes {stable_mosaic.version = 11 : i64} {
  func.func @rae_kernel(%arg0: i32, %arg1: i32, %arg2: memref<8x1024xf32, #tpu.memory_space<vmem>>, %arg3: memref<8x1024xf32, #tpu.memory_space<vmem>>, %arg4: memref<1024x256xbf16, #tpu.memory_space<vmem>>, %arg5: memref<1x256xf32, #tpu.memory_space<vmem>>, %arg6: memref<2x8x256xf32, #tpu.memory_space<vmem>>) attributes {dimension_semantics = [#tpu.dimension_semantics<parallel>, #tpu.dimension_semantics<parallel>], iteration_bounds = array<i64: 1, 2>, scalar_prefetch = 0 : i64, scratch_operands = 0 : i64, tpu.core_type = #tpu.core_type<tc>, window_params = [{transform_indices = @transform_0, window_bounds = array<i64: 8, 1024>}, {transform_indices = @transform_1, window_bounds = array<i64: 8, 1024>}, {transform_indices = @transform_2, window_bounds = array<i64: 1024, 256>}, {transform_indices = @transform_3, window_bounds = array<i64: 1, 256>}, {transform_indices = @transform_4, window_bounds = array<i64: 2, 8, 256>}]} {
    %c0 = arith.constant 0 : index
    %c0_0 = arith.constant 0 : index
    %0 = vector.load %arg4[%c0, %c0_0] : memref<1024x256xbf16, #tpu.memory_space<vmem>>, vector<1024x256xbf16>
    %c0_1 = arith.constant 0 : index
    %c0_2 = arith.constant 0 : index
    %1 = vector.load %arg5[%c0_1, %c0_2] : memref<1x256xf32, #tpu.memory_space<vmem>>, vector<1x256xf32>
    %c0_3 = arith.constant 0 : index
    %c0_4 = arith.constant 0 : index
    %2 = vector.load %arg2[%c0_3, %c0_4] : memref<8x1024xf32, #tpu.memory_space<vmem>>, vector<8x1024xf32>
    %3 = arith.truncf %2 : vector<8x1024xf32> to vector<8x1024xbf16>
    %c0_5 = arith.constant 0 : index
    %c0_6 = arith.constant 0 : index
    %4 = vector.load %arg3[%c0_5, %c0_6] : memref<8x1024xf32, #tpu.memory_space<vmem>>, vector<8x1024xf32>
    %5 = arith.truncf %4 : vector<8x1024xf32> to vector<8x1024xbf16>
    %cst = arith.constant dense<0.000000e+00> : vector<8x256xf32>
    %6 = tpu.matmul %3, %0, %cst {dimension_numbers = #tpu.dot_dimension_numbers<[1], [0], [0], [1], [0, 0, 1, 1], [], []>} : vector<8x1024xbf16>, vector<1024x256xbf16>, vector<8x256xf32> -> vector<8x256xf32>
    %cst_7 = arith.constant dense<0.000000e+00> : vector<8x256xf32>
    %7 = tpu.matmul %5, %0, %cst_7 {dimension_numbers = #tpu.dot_dimension_numbers<[1], [0], [0], [1], [0, 0, 1, 1], [], []>} : vector<8x1024xbf16>, vector<1024x256xbf16>, vector<8x256xf32> -> vector<8x256xf32>
    %8 = vector.broadcast %1 : vector<1x256xf32> to vector<8x256xf32>
    %9 = arith.addf %6, %8 : vector<8x256xf32>
    %10 = math.tanh %9 : vector<8x256xf32>
    %c0_8 = arith.constant 0 : index
    %c0_9 = arith.constant 0 : index
    %c0_10 = arith.constant 0 : index
    %11 = vector.load %arg6[%c0_8, %c0_9, %c0_10] : memref<2x8x256xf32, #tpu.memory_space<vmem>>, vector<1x8x256xf32>
    %12 = vector.shape_cast %11 : vector<1x8x256xf32> to vector<8x256xf32>
    %13 = vector.shape_cast %10 : vector<8x256xf32> to vector<1x8x256xf32>
    tpu.vector_store %arg6[%c0_8, %c0_9, %c0_10], %13 {strides = array<i32>} : memref<2x8x256xf32, #tpu.memory_space<vmem>>, vector<1x8x256xf32>,
    %14 = vector.broadcast %1 : vector<1x256xf32> to vector<8x256xf32>
    %15 = arith.addf %7, %14 : vector<8x256xf32>
    %16 = math.tanh %15 : vector<8x256xf32>
    %c1 = arith.constant 1 : index
    %c0_11 = arith.constant 0 : index
    %c0_12 = arith.constant 0 : index
    %17 = vector.load %arg6[%c1, %c0_11, %c0_12] : memref<2x8x256xf32, #tpu.memory_space<vmem>>, vector<1x8x256xf32>
    %18 = vector.shape_cast %17 : vector<1x8x256xf32> to vector<8x256xf32>
    %19 = vector.shape_cast %16 : vector<8x256xf32> to vector<1x8x256xf32>
    tpu.vector_store %arg6[%c1, %c0_11, %c0_12], %19 {strides = array<i32>} : memref<2x8x256xf32, #tpu.memory_space<vmem>>, vector<1x8x256xf32>,
    return
  }
  func.func @transform_0(%arg0: i32, %arg1: i32) -> (i32, i32) {
    %c0_i32 = arith.constant 0 : i32
    %c0_i32_0 = arith.constant 0 : i32
    return %arg0, %c0_i32 : i32, i32
  }
  func.func @transform_1(%arg0: i32, %arg1: i32) -> (i32, i32) {
    %c0_i32 = arith.constant 0 : i32
    %c0_i32_0 = arith.constant 0 : i32
    return %arg0, %c0_i32 : i32, i32
  }
  func.func @transform_2(%arg0: i32, %arg1: i32) -> (i32, i32) {
    %c0_i32 = arith.constant 0 : i32
    %c0_i32_0 = arith.constant 0 : i32
    return %c0_i32, %arg1 : i32, i32
  }
  func.func @transform_3(%arg0: i32, %arg1: i32) -> (i32, i32) {
    %c0_i32 = arith.constant 0 : i32
    %c0_i32_0 = arith.constant 0 : i32
    return %c0_i32, %arg1 : i32, i32
  }
  func.func @transform_4(%arg0: i32, %arg1: i32) -> (i32, i32, i32) {
    %c0_i32 = arith.constant 0 : i32
    %c0_i32_0 = arith.constant 0 : i32
    return %c0_i32, %arg0, %arg1 : i32, i32, i32
  }
}

</mosaic_0001>

<llo_original>
// kernel: tpu_custom_call.1
$region0: #{tpu_custom_call.1}
  #allocation0 [shape = 'u32[]', space=smem, size = 0x4, offset = 0x4, fixed_abs, tag = 'smem constant byte address 0x4 - core index']
  #allocation1 [shape = 'u32[72,128]{1,0:T(1,128)}', space=vmem, size = 0x9000, scoped, tag = 'internal scratch']
  %s0 = inlined_call_operand.hbm [shape: f32[8,1024], index: 0, kind: input, shape index: {}]
  %s1 = inlined_call_operand.hbm [shape: f32[8,1024], index: 1, kind: input, shape index: {}]
  %s2 = inlined_call_operand.hbm [shape: bf16[1024,512], index: 2, kind: input, shape index: {}]
  %s3 = inlined_call_operand.hbm [shape: f32[1,512], index: 3, kind: input, shape index: {}]
  %s4 = inlined_call_operand.hbm [shape: f32[2,8,512], index: 4, kind: output, shape index: {}]
  %s5 = sld [smem:[#allocation0]]
  $region65: #{tpu_custom_call.1} parent=0
    _
  %s7 = ssub.s32 1, %s5
  %s8 = scalar_select 0, %s7, %s5
  $region1: #{tpu_custom_call.1} parent=0
    #allocation2 [shape = 'u8[32768]{0}', space=vmem, size = 0x8000, scoped, tag = 'input window, operand 0, single buffered']
    #allocation3 [shape = 's32[2]{0}', space=sflag, size = 0x8, scoped, tag = 'scoped memory for tpu_custom_call.1']
    #allocation4 [shape = 's32[2]{0}', space=sflag, size = 0x8, scoped, tag = 'scoped memory for tpu_custom_call.1']
    #allocation5 [shape = 'u8[32768]{0}', space=vmem, size = 0x8000, scoped, tag = 'input window, operand 1, single buffered']
    #allocation6 [shape = 's32[1]{0}', space=sflag, size = 0x4, scoped, tag = 'scoped memory for tpu_custom_call.1']
    #allocation7 [shape = 'u8[1048576]{0}', space=vmem, size = 0x100000, scoped, tag = 'input window, operand 2']
    #allocation8 [shape = 'u8[2048]{0}', space=vmem, size = 0x800, scoped, tag = 'input window, operand 3']
    #allocation9 [shape = 'u8[32768]{0}', space=vmem, size = 0x8000, scoped, tag = 'output window, operand 0']
    %9 = vsyncpa [#allocation3], 0
    %10 = vsyncpa [#allocation6], 0
    %11 = vsyncpa [#allocation4], 0
    %s12 = scalar_lea.sflag [#allocation4], 1
    %13 = vsyncpa %s12, 0
    loop: start=0, step=1, limit=4
    $region2: #{tpu_custom_call.1} parent=1 // loop_pre_header
      _
    $region3: #{tpu_custom_call.1} parent=1 // loop_header
      %s15 = sphi 0, %s19
      %p16 = scmp.ge.s32.totalorder %s15, 4
      %s22 = sphi 0, %s34
      %s23 = sphi 0, %s30
      %s24 = sphi 0, %s22
      %s25 = sphi 0, %s23
      %s26 = sphi 0, %s24
      %s27 = sphi 0, %s25
      %s37 = sphi 0, %s39
      %s40 = sphi 0, %s37
      %s41 = sphi 0, %s40
      %s57 = sphi 0, %s41
      %s63 = sphi 0, %s65
      %s66 = sphi 0, %s63
      %s67 = sphi 0, %s66
      %s83 = sphi 0, %s67
      %s89 = sphi 0, %s91
      %s92 = sphi 0, %s89
      %s93 = sphi 0, %s92
      %s109 = sphi 0, %s93
      %s115 = sphi 0, %s117
      %s118 = sphi 0, %s115
      %s119 = sphi 0, %s118
      %s135 = sphi 0, %s119
      %s143 = sphi 0, %s145
      %s146 = sphi 0, %s143
      %s147 = sphi 0, %s146
      %s163 = sphi 0, %s147
    $region4: #{tpu_custom_call.1} parent=1 // loop_header_branch
      %18 = sbr.rel (%p16) target = $region8
    $region5: #{tpu_custom_call.1} parent=1 // loop_body
      %s20 = ssub.s32 %s15, 1
      %s21 = ssub.s32 %s15, 2
      %s28 = sadd.s32 1, %s23
      %p29 = scmp.ge.s32.totalorder %s28, 2
      %s30 = scalar_select %p29, 0, %s28
      %s31 = sadd.s32 1, %s22
      %s32 = scalar_select %p29, %s31, %s22
      %p33 = scmp.ge.s32.totalorder %s32, 1
      %s34 = scalar_select %p33, 0, %s32
      %s35 = ssub.s32 %s22, %s34
      %p36 = scmp.eq.s32.totalorder %s35, 0
      %s38 = sadd.s32 %s37, 1
      %s39 = scalar_select %p36, %s37, %s38
      %p42 = pneg %p36
      %p43 = scmp.eq.s32.totalorder %s15, 1
      %p44 = por %p42, %p43
      %p45 = scmp.ne.s32.totalorder %s37, %s40
      %p46 = scmp.eq.s32.totalorder %s15, 0
      %p47 = por %p45, %p46
      %p48 = scmp.ne.s32.totalorder %s37, %s40
      %p49 = scmp.eq.s32.totalorder %s20, 1
      %p50 = por %p48, %p49
      %p51 = scmp.ne.s32.totalorder %s40, %s41
      %p52 = scmp.eq.s32.totalorder %s20, 0
      %p53 = por %p51, %p52
      %p54 = scmp.ne.s32.totalorder %s40, %s41
      %p55 = scmp.eq.s32.totalorder %s21, 1
      %p56 = por %p54, %p55
      %p58 = scmp.ne.s32.totalorder %s41, %s57
      %p59 = scmp.eq.s32.totalorder %s21, 0
      %p60 = por %p58, %p59
      %s61 = ssub.s32 %s22, %s34
      %p62 = scmp.eq.s32.totalorder %s61, 0
      %s64 = sadd.s32 %s63, 1
      %s65 = scalar_select %p62, %s63, %s64
      %p68 = pneg %p62
      %p69 = scmp.eq.s32.totalorder %s15, 1
      %p70 = por %p68, %p69
      %p71 = scmp.ne.s32.totalorder %s63, %s66
      %p72 = scmp.eq.s32.totalorder %s15, 0
      %p73 = por %p71, %p72
      %p74 = scmp.ne.s32.totalorder %s63, %s66
      %p75 = scmp.eq.s32.totalorder %s20, 1
      %p76 = por %p74, %p75
      %p77 = scmp.ne.s32.totalorder %s66, %s67
      %p78 = scmp.eq.s32.totalorder %s20, 0
      %p79 = por %p77, %p78
      %p80 = scmp.ne.s32.totalorder %s66, %s67
      %p81 = scmp.eq.s32.totalorder %s21, 1
      %p82 = por %p80, %p81
      %p84 = scmp.ne.s32.totalorder %s67, %s83
      %p85 = scmp.eq.s32.totalorder %s21, 0
      %p86 = por %p84, %p85
      %s87 = ssub.s32 %s23, %s30
      %p88 = scmp.eq.s32.totalorder %s87, 0
      %s90 = sadd.s32 %s89, 1
      %s91 = scalar_select %p88, %s89, %s90
      %p94 = pneg %p88
      %p95 = scmp.eq.s32.totalorder %s15, 1
      %p96 = por %p94, %p95
      %p97 = scmp.ne.s32.totalorder %s89, %s92
      %p98 = scmp.eq.s32.totalorder %s15, 0
      %p99 = por %p97, %p98
      %p100 = scmp.ne.s32.totalorder %s89, %s92
      %p101 = scmp.eq.s32.totalorder %s20, 1
      %p102 = por %p100, %p101
      %p103 = scmp.ne.s32.totalorder %s92, %s93
      %p104 = scmp.eq.s32.totalorder %s20, 0
      %p105 = por %p103, %p104
      %p106 = scmp.ne.s32.totalorder %s92, %s93
      %p107 = scmp.eq.s32.totalorder %s21, 1
      %p108 = por %p106, %p107
      %p110 = scmp.ne.s32.totalorder %s93, %s109
      %p111 = scmp.eq.s32.totalorder %s21, 0
      %p112 = por %p110, %p111
      %s113 = ssub.s32 %s23, %s30
      %p114 = scmp.eq.s32.totalorder %s113, 0
      %s116 = sadd.s32 %s115, 1
      %s117 = scalar_select %p114, %s115, %s116
      %p120 = pneg %p114
      %p121 = scmp.eq.s32.totalorder %s15, 1
      %p122 = por %p120, %p121
      %p123 = scmp.ne.s32.totalorder %s115, %s118
      %p124 = scmp.eq.s32.totalorder %s15, 0
      %p125 = por %p123, %p124
      %p126 = scmp.ne.s32.totalorder %s115, %s118
      %p127 = scmp.eq.s32.totalorder %s20, 1
      %p128 = por %p126, %p127
      %p129 = scmp.ne.s32.totalorder %s118, %s119
      %p130 = scmp.eq.s32.totalorder %s20, 0
      %p131 = por %p129, %p130
      %p132 = scmp.ne.s32.totalorder %s118, %s119
      %p133 = scmp.eq.s32.totalorder %s21, 1
      %p134 = por %p132, %p133
      %p136 = scmp.ne.s32.totalorder %s119, %s135
      %p137 = scmp.eq.s32.totalorder %s21, 0
      %p138 = por %p136, %p137
      %s139 = ssub.s32 %s22, %s34
      %s140 = ssub.s32 %s23, %s30
      %s141 = sor.u32 %s139, %s140
      %p142 = scmp.eq.s32.totalorder %s141, 0
      %s144 = sadd.s32 %s143, 1
      %s145 = scalar_select %p142, %s143, %s144
      %p148 = pneg %p142
      %p149 = scmp.eq.s32.totalorder %s15, 1
      %p150 = por %p148, %p149
      %p151 = scmp.ne.s32.totalorder %s143, %s146
      %p152 = scmp.eq.s32.totalorder %s15, 0
      %p153 = por %p151, %p152
      %p154 = scmp.ne.s32.totalorder %s143, %s146
      %p155 = scmp.eq.s32.totalorder %s20, 1
      %p156 = por %p154, %p155
      %p157 = scmp.ne.s32.totalorder %s146, %s147
      %p158 = scmp.eq.s32.totalorder %s20, 0
      %p159 = por %p157, %p158
      %p160 = scmp.ne.s32.totalorder %s146, %s147
      %p161 = scmp.eq.s32.totalorder %s21, 1
      %p162 = por %p160, %p161
      %p164 = scmp.ne.s32.totalorder %s147, %s163
      %p165 = scmp.eq.s32.totalorder %s21, 0
      %p166 = por %p164, %p165
      %p167 = scmp.le.s32.totalorder 1, %s15
      %p168 = scmp.lt.s32.totalorder %s15, 3
      %p169 = pnand %p167, %p168
      %p170 = pneg %p169
      // Predicated region
      $region9: #{tpu_custom_call.1} parent=5 // pred_check
        _
      $region10: #{tpu_custom_call.1} parent=5 // pred_check_branch
        %172 = sbr.rel (%p169) target = $region12
      $region11: #{tpu_custom_call.1} parent=5 // pred_region
        %s173 = ssub.s32 %s15, 1
        // Predicated region
        $region13: #{tpu_custom_call.1} parent=11 // pred_check
          %p174 = pneg %p53
        $region14: #{tpu_custom_call.1} parent=11 // pred_check_branch
          %176 = sbr.rel (%p174) target = $region16
        $region15: #{tpu_custom_call.1} parent=11 // pred_region
          %178 = vsyncadd [#allocation3], 0
          %s179 = smul.addr %s24, 8
          %s180 = smul.addr %s179, 8
          %s181 = scalar_lea.hbm %s0, %s180
          %s183 = sshll.u32 %s181, 4
          %s184 = int_to_ptr.hbm [resolvable:$true] %s183
          %s185 = sshll.u32 [#allocation2], 4
          %s186 = int_to_ptr.vmem [resolvable:$true] %s185
          %188 = dma.hbm_to_vmem [thread:$0]  %s184, 1024, %s186, [#allocation3]
        $region16: #{tpu_custom_call.1} parent=11 // pred_fallthru
          _
        // Predicated region
        $region17: #{tpu_custom_call.1} parent=11 // pred_check
          %p189 = pneg %p79
        $region18: #{tpu_custom_call.1} parent=11 // pred_check_branch
          %191 = sbr.rel (%p189) target = $region20
        $region19: #{tpu_custom_call.1} parent=11 // pred_region
          %193 = vsyncadd [#allocation6], 0
          %s194 = smul.addr %s24, 8
          %s195 = smul.addr %s194, 8
          %s196 = scalar_lea.hbm %s1, %s195
          %s198 = sshll.u32 %s196, 4
          %s199 = int_to_ptr.hbm [resolvable:$true] %s198
          %s200 = sshll.u32 [#allocation5], 4
          %s201 = int_to_ptr.vmem [resolvable:$true] %s200
          %203 = dma.hbm_to_vmem [thread:$0]  %s199, 1024, %s201, [#allocation6]
        $region20: #{tpu_custom_call.1} parent=11 // pred_fallthru
          _
      $region12: #{tpu_custom_call.1} parent=5 // pred_fallthru
        _
      %p204 = scmp.lt.s32.totalorder %s15, 2
      // Predicated region
      $region21: #{tpu_custom_call.1} parent=5 // pred_check
        %p205 = pneg %p204
      $region22: #{tpu_custom_call.1} parent=5 // pred_check_branch
        %207 = sbr.rel (%p205) target = $region24
      $region23: #{tpu_custom_call.1} parent=5 // pred_region
        // Predicated region
        $region25: #{tpu_custom_call.1} parent=23 // pred_check
          %p208 = pneg %p99
        $region26: #{tpu_custom_call.1} parent=23 // pred_check_branch
          %210 = sbr.rel (%p208) target = $region28
        $region27: #{tpu_custom_call.1} parent=23 // pred_region
          %s211 = sand.u32 %s15, 1
          %s212 = scalar_lea.sflag [#allocation3], %s211
          %s213 = sand.u32 %s89, 1
          %s214 = smul.addr %s213, 1024
          %s215 = scalar_lea.vmem [#allocation7], %s214
          %s216 = smul.u32 2, %s23
          %218 = vsyncadd %s212, 0
          %s219 = smul.addr %s216, 4
          %s220 = scalar_lea.hbm %s2, %s219
          %s221 = sshll.u32 %s220, 4
          %s222 = int_to_ptr.hbm [resolvable:$true] %s221
          %s223 = sshll.u32 %s215, 4
          %s224 = int_to_ptr.vmem [resolvable:$true] %s223
          %229 = dma.hbm_to_vmem [thread:$0]  %s222, 16384, %s224, %s212, 256, 128, 8
        $region28: #{tpu_custom_call.1} parent=23 // pred_fallthru
          _
        // Predicated region
        $region29: #{tpu_custom_call.1} parent=23 // pred_check
          %p230 = pneg %p125
        $region30: #{tpu_custom_call.1} parent=23 // pred_check_branch
          %232 = sbr.rel (%p230) target = $region32
        $region31: #{tpu_custom_call.1} parent=23 // pred_region
          %s233 = sand.u32 %s15, 1
          %s234 = scalar_lea.sflag [#allocation3], %s233
          %s235 = sand.u32 %s115, 1
          %s236 = smul.addr %s235, 2
          %s237 = scalar_lea.vmem [#allocation8], %s236
          %s238 = smul.u32 2, %s23
          %240 = vsyncadd %s234, 0
          %s241 = scalar_lea.hbm %s3, %s238
          %s243 = sshll.u32 %s241, 4
          %s244 = int_to_ptr.hbm [resolvable:$true] %s243
          %s245 = sshll.u32 %s237, 4
          %s246 = int_to_ptr.vmem [resolvable:$true] %s245
          %248 = dma.hbm_to_vmem [thread:$0]  %s244, 32, %s246, %s234
        $region32: #{tpu_custom_call.1} parent=23 // pred_fallthru
          _
      $region24: #{tpu_custom_call.1} parent=5 // pred_fallthru
        _
      %p249 = scmp.le.s32.totalorder 1, %s15
      %p250 = scmp.lt.s32.totalorder %s15, 3
      %p251 = pnand %p249, %p250
      %p252 = pneg %p251
      // Predicated region
      $region33: #{tpu_custom_call.1} parent=5 // pred_check
        _
      $region34: #{tpu_custom_call.1} parent=5 // pred_check_branch
        %254 = sbr.rel (%p251) target = $region36
      $region35: #{tpu_custom_call.1} parent=5 // pred_region
        %s255 = ssub.s32 %s15, 1
        // Predicated region
        $region37: #{tpu_custom_call.1} parent=35 // pred_check
          %p256 = pneg %p53
        $region38: #{tpu_custom_call.1} parent=35 // pred_check_branch
          %258 = sbr.rel (%p256) target = $region40
        $region39: #{tpu_custom_call.1} parent=35 // pred_region
          %260 = dma.done [#allocation3], 1024
        $region40: #{tpu_custom_call.1} parent=35 // pred_fallthru
          _
        // Predicated region
        $region41: #{tpu_custom_call.1} parent=35 // pred_check
          %p261 = pneg %p79
        $region42: #{tpu_custom_call.1} parent=35 // pred_check_branch
          %263 = sbr.rel (%p261) target = $region44
        $region43: #{tpu_custom_call.1} parent=35 // pred_region
          %265 = dma.done [#allocation6], 1024
        $region44: #{tpu_custom_call.1} parent=35 // pred_fallthru
          _
        %s266 = sand.u32 %s20, 1
        %s267 = scalar_lea.sflag [#allocation3], %s266
        %s268 = sand.u32 %s92, 1
        %s269 = smul.addr %s268, 1024
        %s270 = scalar_lea.vmem [#allocation7], %s269
        // Predicated region
        $region45: #{tpu_custom_call.1} parent=35 // pred_check
          %p271 = pneg %p105
        $region46: #{tpu_custom_call.1} parent=35 // pred_check_branch
          %273 = sbr.rel (%p271) target = $region48
        $region47: #{tpu_custom_call.1} parent=35 // pred_region
          %275 = dma.done %s267, 16384
        $region48: #{tpu_custom_call.1} parent=35 // pred_fallthru
          _
        %s276 = sand.u32 %s20, 1
        %s277 = scalar_lea.sflag [#allocation3], %s276
        %s278 = sand.u32 %s118, 1
        %s279 = smul.addr %s278, 2
        %s280 = scalar_lea.vmem [#allocation8], %s279
        // Predicated region
        $region49: #{tpu_custom_call.1} parent=35 // pred_check
          %p281 = pneg %p131
        $region50: #{tpu_custom_call.1} parent=35 // pred_check_branch
          %283 = sbr.rel (%p281) target = $region52
        $region51: #{tpu_custom_call.1} parent=35 // pred_region
          %285 = dma.done %s277, 32
        $region52: #{tpu_custom_call.1} parent=35 // pred_fallthru
          _
        %p286 = pneg %p53
        %p287 = pneg %p50
        %p288 = pneg %p79
        %p289 = pneg %p76
        %s290 = sand.u32 %s20, 1
        %s291 = scalar_lea.sflag [#allocation3], %s290
        %s292 = sand.u32 %s92, 1
        %s293 = smul.addr %s292, 1024
        %s294 = scalar_lea.vmem [#allocation7], %s293
        %p295 = pneg %p105
        %p296 = pneg %p102
        %s297 = sand.u32 %s20, 1
        %s298 = scalar_lea.sflag [#allocation3], %s297
        %s299 = sand.u32 %s118, 1
        %s300 = smul.addr %s299, 2
        %s301 = scalar_lea.vmem [#allocation8], %s300
        %p302 = pneg %p131
        %p303 = pneg %p128
        %p304 = pneg %p159
        %p305 = pneg %p156
        %s306 = sand.u32 %s146, 1
        %s307 = scalar_lea.sflag [#allocation4], %s306
        %s308 = sand.u32 %s146, 1
        %s309 = smul.addr %s308, 32
        %s310 = scalar_lea.vmem [#allocation9], %s309
        %s311 = smul.u32 2, %s25
        %s312 = smul.u32 2, %s25
        %s313 = smul.u32 2, %s25
        %v314 = vld [vmem:[%s270] sm:$0xff]
        %v315 = vld [vmem:[%s270 + $0x8] sm:$0xff]
        %v316 = vld [vmem:[%s270 + $0x10] sm:$0xff]
        %v317 = vld [vmem:[%s270 + $0x18] sm:$0xff]
        %v318 = vld [vmem:[%s270 + $0x20] sm:$0xff]
        %v319 = vld [vmem:[%s270 + $0x28] sm:$0xff]
        %v320 = vld [vmem:[%s270 + $0x30] sm:$0xff]
        %v321 = vld [vmem:[%s270 + $0x38] sm:$0xff]
        %v322 = vld [vmem:[%s270 + $0x40] sm:$0xff]
        %v323 = vld [vmem:[%s270 + $0x48] sm:$0xff]
        %v324 = vld [vmem:[%s270 + $0x50] sm:$0xff]
        %v325 = vld [vmem:[%s270 + $0x58] sm:$0xff]
        %v326 = vld [vmem:[%s270 + $0x60] sm:$0xff]
        %v327 = vld [vmem:[%s270 + $0x68] sm:$0xff]
        %v328 = vld [vmem:[%s270 + $0x70] sm:$0xff]
        %v329 = vld [vmem:[%s270 + $0x78] sm:$0xff]
        %v330 = vld [vmem:[%s270 + $0x80] sm:$0xff]
        %v331 = vld [vmem:[%s270 + $0x88] sm:$0xff]
        %v332 = vld [vmem:[%s270 + $0x90] sm:$0xff]
        %v333 = vld [vmem:[%s270 + $0x98] sm:$0xff]
        %v334 = vld [vmem:[%s270 + $0xa0] sm:$0xff]
        %v335 = vld [vmem:[%s270 + $0xa8] sm:$0xff]
        %v336 = vld [vmem:[%s270 + $0xb0] sm:$0xff]
        %v337 = vld [vmem:[%s270 + $0xb8] sm:$0xff]
        %v338 = vld [vmem:[%s270 + $0xc0] sm:$0xff]
        %v339 = vld [vmem:[%s270 + $0xc8] sm:$0xff]
        %v340 = vld [vmem:[%s270 + $0xd0] sm:$0xff]
        %v341 = vld [vmem:[%s270 + $0xd8] sm:$0xff]
        %v342 = vld [vmem:[%s270 + $0xe0] sm:$0xff]
        %v343 = vld [vmem:[%s270 + $0xe8] sm:$0xff]
        %v344 = vld [vmem:[%s270 + $0xf0] sm:$0xff]
        %v345 = vld [vmem:[%s270 + $0xf8] sm:$0xff]
        %v346 = vld [vmem:[%s270 + $0x100] sm:$0xff]
        %v347 = vld [vmem:[%s270 + $0x108] sm:$0xff]
        %v348 = vld [vmem:[%s270 + $0x110] sm:$0xff]
        %v349 = vld [vmem:[%s270 + $0x118] sm:$0xff]
        %v350 = vld [vmem:[%s270 + $0x120] sm:$0xff]
        %v351 = vld [vmem:[%s270 + $0x128] sm:$0xff]
        %v352 = vld [vmem:[%s270 + $0x130] sm:$0xff]
        %v353 = vld [vmem:[%s270 + $0x138] sm:$0xff]
        %v354 = vld [vmem:[%s270 + $0x140] sm:$0xff]
        %v355 = vld [vmem:[%s270 + $0x148] sm:$0xff]
        %v356 = vld [vmem:[%s270 + $0x150] sm:$0xff]
        %v357 = vld [vmem:[%s270 + $0x158] sm:$0xff]
        %v358 = vld [vmem:[%s270 + $0x160] sm:$0xff]
        %v359 = vld [vmem:[%s270 + $0x168] sm:$0xff]
        %v360 = vld [vmem:[%s270 + $0x170] sm:$0xff]
        %v361 = vld [vmem:[%s270 + $0x178] sm:$0xff]
        %v362 = vld [vmem:[%s270 + $0x180] sm:$0xff]
        %v363 = vld [vmem:[%s270 + $0x188] sm:$0xff]
        %v364 = vld [vmem:[%s270 + $0x190] sm:$0xff]
        %v365 = vld [vmem:[%s270 + $0x198] sm:$0xff]
        %v366 = vld [vmem:[%s270 + $0x1a0] sm:$0xff]
        %v367 = vld [vmem:[%s270 + $0x1a8] sm:$0xff]
        %v368 = vld [vmem:[%s270 + $0x1b0] sm:$0xff]
        %v369 = vld [vmem:[%s270 + $0x1b8] sm:$0xff]
        %v370 = vld [vmem:[%s270 + $0x1c0] sm:$0xff]
        %v371 = vld [vmem:[%s270 + $0x1c8] sm:$0xff]
        %v372 = vld [vmem:[%s270 + $0x1d0] sm:$0xff]
        %v373 = vld [vmem:[%s270 + $0x1d8] sm:$0xff]
        %v374 = vld [vmem:[%s270 + $0x1e0] sm:$0xff]
        %v375 = vld [vmem:[%s270 + $0x1e8] sm:$0xff]
        %v376 = vld [vmem:[%s270 + $0x1f0] sm:$0xff]
        %v377 = vld [vmem:[%s270 + $0x1f8] sm:$0xff]
        %v378 = vld [vmem:[%s270 + $0x200] sm:$0xff]
        %v379 = vld [vmem:[%s270 + $0x208] sm:$0xff]
        %v380 = vld [vmem:[%s270 + $0x210] sm:$0xff]
        %v381 = vld [vmem:[%s270 + $0x218] sm:$0xff]
        %v382 = vld [vmem:[%s270 + $0x220] sm:$0xff]
        %v383 = vld [vmem:[%s270 + $0x228] sm:$0xff]
        %v384 = vld [vmem:[%s270 + $0x230] sm:$0xff]
        %v385 = vld [vmem:[%s270 + $0x238] sm:$0xff]
        %v386 = vld [vmem:[%s270 + $0x240] sm:$0xff]
        %v387 = vld [vmem:[%s270 + $0x248] sm:$0xff]
        %v388 = vld [vmem:[%s270 + $0x250] sm:$0xff]
        %v389 = vld [vmem:[%s270 + $0x258] sm:$0xff]
        %v390 = vld [vmem:[%s270 + $0x260] sm:$0xff]
        %v391 = vld [vmem:[%s270 + $0x268] sm:$0xff]
        %v392 = vld [vmem:[%s270 + $0x270] sm:$0xff]
        %v393 = vld [vmem:[%s270 + $0x278] sm:$0xff]
        %v394 = vld [vmem:[%s270 + $0x280] sm:$0xff]
        %v395 = vld [vmem:[%s270 + $0x288] sm:$0xff]
        %v396 = vld [vmem:[%s270 + $0x290] sm:$0xff]
        %v397 = vld [vmem:[%s270 + $0x298] sm:$0xff]
        %v398 = vld [vmem:[%s270 + $0x2a0] sm:$0xff]
        %v399 = vld [vmem:[%s270 + $0x2a8] sm:$0xff]
        %v400 = vld [vmem:[%s270 + $0x2b0] sm:$0xff]
        %v401 = vld [vmem:[%s270 + $0x2b8] sm:$0xff]
        %v402 = vld [vmem:[%s270 + $0x2c0] sm:$0xff]
        %v403 = vld [vmem:[%s270 + $0x2c8] sm:$0xff]
        %v404 = vld [vmem:[%s270 + $0x2d0] sm:$0xff]
        %v405 = vld [vmem:[%s270 + $0x2d8] sm:$0xff]
        %v406 = vld [vmem:[%s270 + $0x2e0] sm:$0xff]
        %v407 = vld [vmem:[%s270 + $0x2e8] sm:$0xff]
        %v408 = vld [vmem:[%s270 + $0x2f0] sm:$0xff]
        %v409 = vld [vmem:[%s270 + $0x2f8] sm:$0xff]
        %v410 = vld [vmem:[%s270 + $0x300] sm:$0xff]
        %v411 = vld [vmem:[%s270 + $0x308] sm:$0xff]
        %v412 = vld [vmem:[%s270 + $0x310] sm:$0xff]
        %v413 = vld [vmem:[%s270 + $0x318] sm:$0xff]
        %v414 = vld [vmem:[%s270 + $0x320] sm:$0xff]
        %v415 = vld [vmem:[%s270 + $0x328] sm:$0xff]
        %v416 = vld [vmem:[%s270 + $0x330] sm:$0xff]
        %v417 = vld [vmem:[%s270 + $0x338] sm:$0xff]
        %v418 = vld [vmem:[%s270 + $0x340] sm:$0xff]
        %v419 = vld [vmem:[%s270 + $0x348] sm:$0xff]
        %v420 = vld [vmem:[%s270 + $0x350] sm:$0xff]
        %v421 = vld [vmem:[%s270 + $0x358] sm:$0xff]
        %v422 = vld [vmem:[%s270 + $0x360] sm:$0xff]
        %v423 = vld [vmem:[%s270 + $0x368] sm:$0xff]
        %v424 = vld [vmem:[%s270 + $0x370] sm:$0xff]
        %v425 = vld [vmem:[%s270 + $0x378] sm:$0xff]
        %v426 = vld [vmem:[%s270 + $0x380] sm:$0xff]
        %v427 = vld [vmem:[%s270 + $0x388] sm:$0xff]
        %v428 = vld [vmem:[%s270 + $0x390] sm:$0xff]
        %v429 = vld [vmem:[%s270 + $0x398] sm:$0xff]
        %v430 = vld [vmem:[%s270 + $0x3a0] sm:$0xff]
        %v431 = vld [vmem:[%s270 + $0x3a8] sm:$0xff]
        %v432 = vld [vmem:[%s270 + $0x3b0] sm:$0xff]
        %v433 = vld [vmem:[%s270 + $0x3b8] sm:$0xff]
        %v434 = vld [vmem:[%s270 + $0x3c0] sm:$0xff]
        %v435 = vld [vmem:[%s270 + $0x3c8] sm:$0xff]
        %v436 = vld [vmem:[%s270 + $0x3d0] sm:$0xff]
        %v437 = vld [vmem:[%s270 + $0x3d8] sm:$0xff]
        %v438 = vld [vmem:[%s270 + $0x3e0] sm:$0xff]
        %v439 = vld [vmem:[%s270 + $0x3e8] sm:$0xff]
        %v440 = vld [vmem:[%s270 + $0x3f0] sm:$0xff]
        %v441 = vld [vmem:[%s270 + $0x3f8] sm:$0xff]
        %v442 = vld [vmem:[%s280] sm:$0x3]
        %v443 = vld [vmem:[#allocation2] sm:$0xff]
        %v444 = vld [vmem:[#allocation2 + $0x8] sm:$0xff]
        %v445 = vld [vmem:[#allocation2 + $0x10] sm:$0xff]
        %v446 = vld [vmem:[#allocation2 + $0x18] sm:$0xff]
        %v447 = vld [vmem:[#allocation2 + $0x20] sm:$0xff]
        %v448 = vld [vmem:[#allocation2 + $0x28] sm:$0xff]
        %v449 = vld [vmem:[#allocation2 + $0x30] sm:$0xff]
        %v450 = vld [vmem:[#allocation2 + $0x38] sm:$0xff]
        %v451 = vpack.c.bf16 %v443, %v443
        %v452 = vpack.c.bf16 %v444, %v444
        %v453 = vpack.c.bf16 %v445, %v445
        %v454 = vpack.c.bf16 %v446, %v446
        %v455 = vpack.c.bf16 %v447, %v447
        %v456 = vpack.c.bf16 %v448, %v448
        %v457 = vpack.c.bf16 %v449, %v449
        %v458 = vpack.c.bf16 %v450, %v450
        %v459 = vld [vmem:[#allocation5] sm:$0xff]
        %v460 = vld [vmem:[#allocation5 + $0x8] sm:$0xff]
        %v461 = vld [vmem:[#allocation5 + $0x10] sm:$0xff]
        %v462 = vld [vmem:[#allocation5 + $0x18] sm:$0xff]
        %v463 = vld [vmem:[#allocation5 + $0x20] sm:$0xff]
        %v464 = vld [vmem:[#allocation5 + $0x28] sm:$0xff]
        %v465 = vld [vmem:[#allocation5 + $0x30] sm:$0xff]
        %v466 = vld [vmem:[#allocation5 + $0x38] sm:$0xff]
        %v467 = vpack.c.bf16 %v459, %v459
        %v468 = vpack.c.bf16 %v460, %v460
        %v469 = vpack.c.bf16 %v461, %v461
        %v470 = vpack.c.bf16 %v462, %v462
        %v471 = vpack.c.bf16 %v463, %v463
        %v472 = vpack.c.bf16 %v464, %v464
        %v473 = vpack.c.bf16 %v465, %v465
        %v474 = vpack.c.bf16 %v466, %v466
        %v476 = vperm.slane %v442, 0
        %v477 = vperm.slane %v442, 1
        %v608 = vunpack.c.l.b16 %v314
        %v609 = vunpack.c.h.b16 %v314
        %v610 = vunpack.c.l.b16 %v315
        %v611 = vunpack.c.h.b16 %v315
        %v612 = vunpack.c.l.b16 %v316
        %v613 = vunpack.c.h.b16 %v316
        %v614 = vunpack.c.l.b16 %v317
        %v615 = vunpack.c.h.b16 %v317
        %v616 = vunpack.c.l.b16 %v318
        %v617 = vunpack.c.h.b16 %v318
        %v618 = vunpack.c.l.b16 %v319
        %v619 = vunpack.c.h.b16 %v319
        %v620 = vunpack.c.l.b16 %v320
        %v621 = vunpack.c.h.b16 %v320
        %v622 = vunpack.c.l.b16 %v321
        %v623 = vunpack.c.h.b16 %v321
        %v624 = vunpack.c.l.b16 %v322
        %v625 = vunpack.c.h.b16 %v322
        %v626 = vunpack.c.l.b16 %v323
        %v627 = vunpack.c.h.b16 %v323
        %v628 = vunpack.c.l.b16 %v324
        %v629 = vunpack.c.h.b16 %v324
        %v630 = vunpack.c.l.b16 %v325
        %v631 = vunpack.c.h.b16 %v325
        %v632 = vunpack.c.l.b16 %v326
        %v633 = vunpack.c.h.b16 %v326
        %v634 = vunpack.c.l.b16 %v327
        %v635 = vunpack.c.h.b16 %v327
        %v636 = vunpack.c.l.b16 %v328
        %v637 = vunpack.c.h.b16 %v328
        %v638 = vunpack.c.l.b16 %v329
        %v639 = vunpack.c.h.b16 %v329
        %v640 = vunpack.c.l.b16 %v330
        %v641 = vunpack.c.h.b16 %v330
        %v642 = vunpack.c.l.b16 %v331
        %v643 = vunpack.c.h.b16 %v331
        %v644 = vunpack.c.l.b16 %v332
        %v645 = vunpack.c.h.b16 %v332
        %v646 = vunpack.c.l.b16 %v333
        %v647 = vunpack.c.h.b16 %v333
        %v648 = vunpack.c.l.b16 %v334
        %v649 = vunpack.c.h.b16 %v334
        %v650 = vunpack.c.l.b16 %v335
        %v651 = vunpack.c.h.b16 %v335
        %v652 = vunpack.c.l.b16 %v336
        %v653 = vunpack.c.h.b16 %v336
        %v654 = vunpack.c.l.b16 %v337
        %v655 = vunpack.c.h.b16 %v337
        %v656 = vunpack.c.l.b16 %v338
        %v657 = vunpack.c.h.b16 %v338
        %v658 = vunpack.c.l.b16 %v339
        %v659 = vunpack.c.h.b16 %v339
        %v660 = vunpack.c.l.b16 %v340
        %v661 = vunpack.c.h.b16 %v340
        %v662 = vunpack.c.l.b16 %v341
        %v663 = vunpack.c.h.b16 %v341
        %v664 = vunpack.c.l.b16 %v342
        %v665 = vunpack.c.h.b16 %v342
        %v666 = vunpack.c.l.b16 %v343
        %v667 = vunpack.c.h.b16 %v343
        %v668 = vunpack.c.l.b16 %v344
        %v669 = vunpack.c.h.b16 %v344
        %v670 = vunpack.c.l.b16 %v345
        %v671 = vunpack.c.h.b16 %v345
        %v672 = vunpack.c.l.b16 %v346
        %v673 = vunpack.c.h.b16 %v346
        %v674 = vunpack.c.l.b16 %v347
        %v675 = vunpack.c.h.b16 %v347
        %v676 = vunpack.c.l.b16 %v348
        %v677 = vunpack.c.h.b16 %v348
        %v678 = vunpack.c.l.b16 %v349
        %v679 = vunpack.c.h.b16 %v349
        %v680 = vunpack.c.l.b16 %v350
        %v681 = vunpack.c.h.b16 %v350
        %v682 = vunpack.c.l.b16 %v351
        %v683 = vunpack.c.h.b16 %v351
        %v684 = vunpack.c.l.b16 %v352
        %v685 = vunpack.c.h.b16 %v352
        %v686 = vunpack.c.l.b16 %v353
        %v687 = vunpack.c.h.b16 %v353
        %v688 = vunpack.c.l.b16 %v354
        %v689 = vunpack.c.h.b16 %v354
        %v690 = vunpack.c.l.b16 %v355
        %v691 = vunpack.c.h.b16 %v355
        %v692 = vunpack.c.l.b16 %v356
        %v693 = vunpack.c.h.b16 %v356
        %v694 = vunpack.c.l.b16 %v357
        %v695 = vunpack.c.h.b16 %v357
        %v696 = vunpack.c.l.b16 %v358
        %v697 = vunpack.c.h.b16 %v358
        %v698 = vunpack.c.l.b16 %v359
        %v699 = vunpack.c.h.b16 %v359
        %v700 = vunpack.c.l.b16 %v360
        %v701 = vunpack.c.h.b16 %v360
        %v702 = vunpack.c.l.b16 %v361
        %v703 = vunpack.c.h.b16 %v361
        %v704 = vunpack.c.l.b16 %v362
        %v705 = vunpack.c.h.b16 %v362
        %v706 = vunpack.c.l.b16 %v363
        %v707 = vunpack.c.h.b16 %v363
        %v708 = vunpack.c.l.b16 %v364
        %v709 = vunpack.c.h.b16 %v364
        %v710 = vunpack.c.l.b16 %v365
        %v711 = vunpack.c.h.b16 %v365
        %v712 = vunpack.c.l.b16 %v366
        %v713 = vunpack.c.h.b16 %v366
        %v714 = vunpack.c.l.b16 %v367
        %v715 = vunpack.c.h.b16 %v367
        %v716 = vunpack.c.l.b16 %v368
        %v717 = vunpack.c.h.b16 %v368
        %v718 = vunpack.c.l.b16 %v369
        %v719 = vunpack.c.h.b16 %v369
        %v720 = vunpack.c.l.b16 %v370
        %v721 = vunpack.c.h.b16 %v370
        %v722 = vunpack.c.l.b16 %v371
        %v723 = vunpack.c.h.b16 %v371
        %v724 = vunpack.c.l.b16 %v372
        %v725 = vunpack.c.h.b16 %v372
        %v726 = vunpack.c.l.b16 %v373
        %v727 = vunpack.c.h.b16 %v373
        %v728 = vunpack.c.l.b16 %v374
        %v729 = vunpack.c.h.b16 %v374
        %v730 = vunpack.c.l.b16 %v375
        %v731 = vunpack.c.h.b16 %v375
        %v732 = vunpack.c.l.b16 %v376
        %v733 = vunpack.c.h.b16 %v376
        %v734 = vunpack.c.l.b16 %v377
        %v735 = vunpack.c.h.b16 %v377
        %v736 = vunpack.c.l.b16 %v378
        %v737 = vunpack.c.h.b16 %v378
        %v738 = vunpack.c.l.b16 %v379
        %v739 = vunpack.c.h.b16 %v379
        %v740 = vunpack.c.l.b16 %v380
        %v741 = vunpack.c.h.b16 %v380
        %v742 = vunpack.c.l.b16 %v381
        %v743 = vunpack.c.h.b16 %v381
        %v744 = vunpack.c.l.b16 %v382
        %v745 = vunpack.c.h.b16 %v382
        %v746 = vunpack.c.l.b16 %v383
        %v747 = vunpack.c.h.b16 %v383
        %v748 = vunpack.c.l.b16 %v384
        %v749 = vunpack.c.h.b16 %v384
        %v750 = vunpack.c.l.b16 %v385
        %v751 = vunpack.c.h.b16 %v385
        %v752 = vunpack.c.l.b16 %v386
        %v753 = vunpack.c.h.b16 %v386
        %v754 = vunpack.c.l.b16 %v387
        %v755 = vunpack.c.h.b16 %v387
        %v756 = vunpack.c.l.b16 %v388
        %v757 = vunpack.c.h.b16 %v388
        %v758 = vunpack.c.l.b16 %v389
        %v759 = vunpack.c.h.b16 %v389
        %v760 = vunpack.c.l.b16 %v390
        %v761 = vunpack.c.h.b16 %v390
        %v762 = vunpack.c.l.b16 %v391
        %v763 = vunpack.c.h.b16 %v391
        %v764 = vunpack.c.l.b16 %v392
        %v765 = vunpack.c.h.b16 %v392
        %v766 = vunpack.c.l.b16 %v393
        %v767 = vunpack.c.h.b16 %v393
        %v768 = vunpack.c.l.b16 %v394
        %v769 = vunpack.c.h.b16 %v394
        %v770 = vunpack.c.l.b16 %v395
        %v771 = vunpack.c.h.b16 %v395
        %v772 = vunpack.c.l.b16 %v396
        %v773 = vunpack.c.h.b16 %v396
        %v774 = vunpack.c.l.b16 %v397
        %v775 = vunpack.c.h.b16 %v397
        %v776 = vunpack.c.l.b16 %v398
        %v777 = vunpack.c.h.b16 %v398
        %v778 = vunpack.c.l.b16 %v399
        %v779 = vunpack.c.h.b16 %v399
        %v780 = vunpack.c.l.b16 %v400
        %v781 = vunpack.c.h.b16 %v400
        %v782 = vunpack.c.l.b16 %v401
        %v783 = vunpack.c.h.b16 %v401
        %v784 = vunpack.c.l.b16 %v402
        %v785 = vunpack.c.h.b16 %v402
        %v786 = vunpack.c.l.b16 %v403
        %v787 = vunpack.c.h.b16 %v403
        %v788 = vunpack.c.l.b16 %v404
        %v789 = vunpack.c.h.b16 %v404
        %v790 = vunpack.c.l.b16 %v405
        %v791 = vunpack.c.h.b16 %v405
        %v792 = vunpack.c.l.b16 %v406
        %v793 = vunpack.c.h.b16 %v406
        %v794 = vunpack.c.l.b16 %v407
        %v795 = vunpack.c.h.b16 %v407
        %v796 = vunpack.c.l.b16 %v408
        %v797 = vunpack.c.h.b16 %v408
        %v798 = vunpack.c.l.b16 %v409
        %v799 = vunpack.c.h.b16 %v409
        %v800 = vunpack.c.l.b16 %v410
        %v801 = vunpack.c.h.b16 %v410
        %v802 = vunpack.c.l.b16 %v411
        %v803 = vunpack.c.h.b16 %v411
        %v804 = vunpack.c.l.b16 %v412
        %v805 = vunpack.c.h.b16 %v412
        %v806 = vunpack.c.l.b16 %v413
        %v807 = vunpack.c.h.b16 %v413
        %v808 = vunpack.c.l.b16 %v414
        %v809 = vunpack.c.h.b16 %v414
        %v810 = vunpack.c.l.b16 %v415
        %v811 = vunpack.c.h.b16 %v415
        %v812 = vunpack.c.l.b16 %v416
        %v813 = vunpack.c.h.b16 %v416
        %v814 = vunpack.c.l.b16 %v417
        %v815 = vunpack.c.h.b16 %v417
        %v816 = vunpack.c.l.b16 %v418
        %v817 = vunpack.c.h.b16 %v418
        %v818 = vunpack.c.l.b16 %v419
        %v819 = vunpack.c.h.b16 %v419
        %v820 = vunpack.c.l.b16 %v420
        %v821 = vunpack.c.h.b16 %v420
        %v822 = vunpack.c.l.b16 %v421
        %v823 = vunpack.c.h.b16 %v421
        %v824 = vunpack.c.l.b16 %v422
        %v825 = vunpack.c.h.b16 %v422
        %v826 = vunpack.c.l.b16 %v423
        %v827 = vunpack.c.h.b16 %v423
        %v828 = vunpack.c.l.b16 %v424
        %v829 = vunpack.c.h.b16 %v424
        %v830 = vunpack.c.l.b16 %v425
        %v831 = vunpack.c.h.b16 %v425
        %v832 = vunpack.c.l.b16 %v426
        %v833 = vunpack.c.h.b16 %v426
        %v834 = vunpack.c.l.b16 %v427
        %v835 = vunpack.c.h.b16 %v427
        %v836 = vunpack.c.l.b16 %v428
        %v837 = vunpack.c.h.b16 %v428
        %v838 = vunpack.c.l.b16 %v429
        %v839 = vunpack.c.h.b16 %v429
        %v840 = vunpack.c.l.b16 %v430
        %v841 = vunpack.c.h.b16 %v430
        %v842 = vunpack.c.l.b16 %v431
        %v843 = vunpack.c.h.b16 %v431
        %v844 = vunpack.c.l.b16 %v432
        %v845 = vunpack.c.h.b16 %v432
        %v846 = vunpack.c.l.b16 %v433
        %v847 = vunpack.c.h.b16 %v433
        %v848 = vunpack.c.l.b16 %v434
        %v849 = vunpack.c.h.b16 %v434
        %v850 = vunpack.c.l.b16 %v435
        %v851 = vunpack.c.h.b16 %v435
        %v852 = vunpack.c.l.b16 %v436
        %v853 = vunpack.c.h.b16 %v436
        %v854 = vunpack.c.l.b16 %v437
        %v855 = vunpack.c.h.b16 %v437
        %v856 = vunpack.c.l.b16 %v438
        %v857 = vunpack.c.h.b16 %v438
        %v858 = vunpack.c.l.b16 %v439
        %v859 = vunpack.c.h.b16 %v439
        %v860 = vunpack.c.l.b16 %v440
        %v861 = vunpack.c.h.b16 %v440
        %v862 = vunpack.c.l.b16 %v441
        %v863 = vunpack.c.h.b16 %v441
        %v864 = vpack.c.b16 %v610, %v608
        %v865 = vpack.c.b16 %v611, %v609
        %v866 = vpack.c.b16 %v614, %v612
        %v867 = vpack.c.b16 %v615, %v613
        %v868 = vpack.c.b16 %v618, %v616
        %v869 = vpack.c.b16 %v619, %v617
        %v870 = vpack.c.b16 %v622, %v620
        %v871 = vpack.c.b16 %v623, %v621
        %v872 = vpack.c.b16 %v626, %v624
        %v873 = vpack.c.b16 %v627, %v625
        %v874 = vpack.c.b16 %v630, %v628
        %v875 = vpack.c.b16 %v631, %v629
        %v876 = vpack.c.b16 %v634, %v632
        %v877 = vpack.c.b16 %v635, %v633
        %v878 = vpack.c.b16 %v638, %v636
        %v879 = vpack.c.b16 %v639, %v637
        %v880 = vpack.c.b16 %v642, %v640
        %v881 = vpack.c.b16 %v643, %v641
        %v882 = vpack.c.b16 %v646, %v644
        %v883 = vpack.c.b16 %v647, %v645
        %v884 = vpack.c.b16 %v650, %v648
        %v885 = vpack.c.b16 %v651, %v649
        %v886 = vpack.c.b16 %v654, %v652
        %v887 = vpack.c.b16 %v655, %v653
        %v888 = vpack.c.b16 %v658, %v656
        %v889 = vpack.c.b16 %v659, %v657
        %v890 = vpack.c.b16 %v662, %v660
        %v891 = vpack.c.b16 %v663, %v661
        %v892 = vpack.c.b16 %v666, %v664
        %v893 = vpack.c.b16 %v667, %v665
        %v894 = vpack.c.b16 %v670, %v668
        %v895 = vpack.c.b16 %v671, %v669
        %v896 = vpack.c.b16 %v674, %v672
        %v897 = vpack.c.b16 %v675, %v673
        %v898 = vpack.c.b16 %v678, %v676
        %v899 = vpack.c.b16 %v679, %v677
        %v900 = vpack.c.b16 %v682, %v680
        %v901 = vpack.c.b16 %v683, %v681
        %v902 = vpack.c.b16 %v686, %v684
        %v903 = vpack.c.b16 %v687, %v685
        %v904 = vpack.c.b16 %v690, %v688
        %v905 = vpack.c.b16 %v691, %v689
        %v906 = vpack.c.b16 %v694, %v692
        %v907 = vpack.c.b16 %v695, %v693
        %v908 = vpack.c.b16 %v698, %v696
        %v909 = vpack.c.b16 %v699, %v697
        %v910 = vpack.c.b16 %v702, %v700
        %v911 = vpack.c.b16 %v703, %v701
        %v912 = vpack.c.b16 %v706, %v704
        %v913 = vpack.c.b16 %v707, %v705
        %v914 = vpack.c.b16 %v710, %v708
        %v915 = vpack.c.b16 %v711, %v709
        %v916 = vpack.c.b16 %v714, %v712
        %v917 = vpack.c.b16 %v715, %v713
        %v918 = vpack.c.b16 %v718, %v716
        %v919 = vpack.c.b16 %v719, %v717
        %v920 = vpack.c.b16 %v722, %v720
        %v921 = vpack.c.b16 %v723, %v721
        %v922 = vpack.c.b16 %v726, %v724
        %v923 = vpack.c.b16 %v727, %v725
        %v924 = vpack.c.b16 %v730, %v728
        %v925 = vpack.c.b16 %v731, %v729
        %v926 = vpack.c.b16 %v734, %v732
        %v927 = vpack.c.b16 %v735, %v733
        %v928 = vpack.c.b16 %v738, %v736
        %v929 = vpack.c.b16 %v739, %v737
        %v930 = vpack.c.b16 %v742, %v740
        %v931 = vpack.c.b16 %v743, %v741
        %v932 = vpack.c.b16 %v746, %v744
        %v933 = vpack.c.b16 %v747, %v745
        %v934 = vpack.c.b16 %v750, %v748
        %v935 = vpack.c.b16 %v751, %v749
        %v936 = vpack.c.b16 %v754, %v752
        %v937 = vpack.c.b16 %v755, %v753
        %v938 = vpack.c.b16 %v758, %v756
        %v939 = vpack.c.b16 %v759, %v757
        %v940 = vpack.c.b16 %v762, %v760
        %v941 = vpack.c.b16 %v763, %v761
        %v942 = vpack.c.b16 %v766, %v764
        %v943 = vpack.c.b16 %v767, %v765
        %v944 = vpack.c.b16 %v770, %v768
        %v945 = vpack.c.b16 %v771, %v769
        %v946 = vpack.c.b16 %v774, %v772
        %v947 = vpack.c.b16 %v775, %v773
        %v948 = vpack.c.b16 %v778, %v776
        %v949 = vpack.c.b16 %v779, %v777
        %v950 = vpack.c.b16 %v782, %v780
        %v951 = vpack.c.b16 %v783, %v781
        %v952 = vpack.c.b16 %v786, %v784
        %v953 = vpack.c.b16 %v787, %v785
        %v954 = vpack.c.b16 %v790, %v788
        %v955 = vpack.c.b16 %v791, %v789
        %v956 = vpack.c.b16 %v794, %v792
        %v957 = vpack.c.b16 %v795, %v793
        %v958 = vpack.c.b16 %v798, %v796
        %v959 = vpack.c.b16 %v799, %v797
        %v960 = vpack.c.b16 %v802, %v800
        %v961 = vpack.c.b16 %v803, %v801
        %v962 = vpack.c.b16 %v806, %v804
        %v963 = vpack.c.b16 %v807, %v805
        %v964 = vpack.c.b16 %v810, %v808
        %v965 = vpack.c.b16 %v811, %v809
        %v966 = vpack.c.b16 %v814, %v812
        %v967 = vpack.c.b16 %v815, %v813
        %v968 = vpack.c.b16 %v818, %v816
        %v969 = vpack.c.b16 %v819, %v817
        %v970 = vpack.c.b16 %v822, %v820
        %v971 = vpack.c.b16 %v823, %v821
        %v972 = vpack.c.b16 %v826, %v824
        %v973 = vpack.c.b16 %v827, %v825
        %v974 = vpack.c.b16 %v830, %v828
        %v975 = vpack.c.b16 %v831, %v829
        %v976 = vpack.c.b16 %v834, %v832
        %v977 = vpack.c.b16 %v835, %v833
        %v978 = vpack.c.b16 %v838, %v836
        %v979 = vpack.c.b16 %v839, %v837
        %v980 = vpack.c.b16 %v842, %v840
        %v981 = vpack.c.b16 %v843, %v841
        %v982 = vpack.c.b16 %v846, %v844
        %v983 = vpack.c.b16 %v847, %v845
        %v984 = vpack.c.b16 %v850, %v848
        %v985 = vpack.c.b16 %v851, %v849
        %v986 = vpack.c.b16 %v854, %v852
        %v987 = vpack.c.b16 %v855, %v853
        %v988 = vpack.c.b16 %v858, %v856
        %v989 = vpack.c.b16 %v859, %v857
        %v990 = vpack.c.b16 %v862, %v860
        %v991 = vpack.c.b16 %v863, %v861
        %1120 = vmatpush.bf16.msra.mxu0 %v878
        %1121 = vmatpush.bf16.msra.mxu0 %v876
        %1122 = vmatpush.bf16.msra.mxu0 %v874
        %1123 = vmatpush.bf16.msra.mxu0 %v872
        %1124 = vmatpush.bf16.msra.mxu0 %v870
        %1125 = vmatpush.bf16.msra.mxu0 %v868
        %1126 = vmatpush.bf16.msra.mxu0 %v866
        %1127 = vmatpush.bf16.msra.mxu0 %v864
        %1128 = vmatmul.bf16.gmra.mxu0 %v451
        %v1129 = vpop.f32.mrf.mxu0
        %v1130 = vadd.f32 %v476, %v1129
        %v1131 = vpop.f32.mrf.mxu0
        %1132 = vdwg.mxu0
        %1133 = vmatpush.bf16.msra.mxu0 %v894
        %1134 = vmatpush.bf16.msra.mxu0 %v892
        %1135 = vmatpush.bf16.msra.mxu0 %v890
        %1136 = vmatpush.bf16.msra.mxu0 %v888
        %1137 = vmatpush.bf16.msra.mxu0 %v886
        %1138 = vmatpush.bf16.msra.mxu0 %v884
        %1139 = vmatpush.bf16.msra.mxu0 %v882
        %1140 = vmatpush.bf16.msra.mxu0 %v880
        %1141 = vmatmul.bf16.gmra.mxu0 %v452
        %v1142 = vpop.f32.mrf.mxu0
        %v1143 = vadd.f32 %v1130, %v1142
        %v1144 = vpop.f32.mrf.mxu0
        %1145 = vdwg.mxu0
        %1146 = vmatpush.bf16.msra.mxu0 %v910
        %1147 = vmatpush.bf16.msra.mxu0 %v908
        %1148 = vmatpush.bf16.msra.mxu0 %v906
        %1149 = vmatpush.bf16.msra.mxu0 %v904
        %1150 = vmatpush.bf16.msra.mxu0 %v902
        %1151 = vmatpush.bf16.msra.mxu0 %v900
        %1152 = vmatpush.bf16.msra.mxu0 %v898
        %1153 = vmatpush.bf16.msra.mxu0 %v896
        %1154 = vmatmul.bf16.gmra.mxu0 %v453
        %v1155 = vpop.f32.mrf.mxu0
        %v1156 = vadd.f32 %v1143, %v1155
        %v1157 = vpop.f32.mrf.mxu0
        %1158 = vdwg.mxu0
        %1159 = vmatpush.bf16.msra.mxu0 %v926
        %1160 = vmatpush.bf16.msra.mxu0 %v924
        %1161 = vmatpush.bf16.msra.mxu0 %v922
        %1162 = vmatpush.bf16.msra.mxu0 %v920
        %1163 = vmatpush.bf16.msra.mxu0 %v918
        %1164 = vmatpush.bf16.msra.mxu0 %v916
        %1165 = vmatpush.bf16.msra.mxu0 %v914
        %1166 = vmatpush.bf16.msra.mxu0 %v912
        %1167 = vmatmul.bf16.gmra.mxu0 %v454
        %v1168 = vpop.f32.mrf.mxu0
        %v1169 = vadd.f32 %v1156, %v1168
        %v1170 = vpop.f32.mrf.mxu0
        %1171 = vdwg.mxu0
        %1172 = vmatpush.bf16.msra.mxu0 %v942
        %1173 = vmatpush.bf16.msra.mxu0 %v940
        %1174 = vmatpush.bf16.msra.mxu0 %v938
        %1175 = vmatpush.bf16.msra.mxu0 %v936
        %1176 = vmatpush.bf16.msra.mxu0 %v934
        %1177 = vmatpush.bf16.msra.mxu0 %v932
        %1178 = vmatpush.bf16.msra.mxu0 %v930
        %1179 = vmatpush.bf16.msra.mxu0 %v928
        %1180 = vmatmul.bf16.gmra.mxu0 %v455
        %v1181 = vpop.f32.mrf.mxu0
        %v1182 = vadd.f32 %v1169, %v1181
        %v1183 = vpop.f32.mrf.mxu0
        %1184 = vdwg.mxu0
        %1185 = vmatpush.bf16.msra.mxu0 %v958
        %1186 = vmatpush.bf16.msra.mxu0 %v956
        %1187 = vmatpush.bf16.msra.mxu0 %v954
        %1188 = vmatpush.bf16.msra.mxu0 %v952
        %1189 = vmatpush.bf16.msra.mxu0 %v950
        %1190 = vmatpush.bf16.msra.mxu0 %v948
        %1191 = vmatpush.bf16.msra.mxu0 %v946
        %1192 = vmatpush.bf16.msra.mxu0 %v944
        %1193 = vmatmul.bf16.gmra.mxu0 %v456
        %v1194 = vpop.f32.mrf.mxu0
        %v1195 = vadd.f32 %v1182, %v1194
        %v1196 = vpop.f32.mrf.mxu0
        %1197 = vdwg.mxu0
        %1198 = vmatpush.bf16.msra.mxu0 %v974
        %1199 = vmatpush.bf16.msra.mxu0 %v972
        %1200 = vmatpush.bf16.msra.mxu0 %v970
        %1201 = vmatpush.bf16.msra.mxu0 %v968
        %1202 = vmatpush.bf16.msra.mxu0 %v966
        %1203 = vmatpush.bf16.msra.mxu0 %v964
        %1204 = vmatpush.bf16.msra.mxu0 %v962
        %1205 = vmatpush.bf16.msra.mxu0 %v960
        %1206 = vmatmul.bf16.gmra.mxu0 %v457
        %v1207 = vpop.f32.mrf.mxu0
        %v1208 = vadd.f32 %v1195, %v1207
        %v1209 = vpop.f32.mrf.mxu0
        %1210 = vdwg.mxu0
        %1211 = vmatpush.bf16.msra.mxu0 %v990
        %1212 = vmatpush.bf16.msra.mxu0 %v988
        %1213 = vmatpush.bf16.msra.mxu0 %v986
        %1214 = vmatpush.bf16.msra.mxu0 %v984
        %1215 = vmatpush.bf16.msra.mxu0 %v982
        %1216 = vmatpush.bf16.msra.mxu0 %v980
        %1217 = vmatpush.bf16.msra.mxu0 %v978
        %1218 = vmatpush.bf16.msra.mxu0 %v976
        %1219 = vmatmul.bf16.gmra.mxu0 %v458
        %v1220 = vpop.f32.mrf.mxu0
        %v1221 = vadd.f32 %v1208, %v1220
        %v1222 = vpop.f32.mrf.mxu0
        %1223 = vdwg.mxu0
        %1224 = vmatpush.bf16.msra.mxu0 %v879
        %1225 = vmatpush.bf16.msra.mxu0 %v877
        %1226 = vmatpush.bf16.msra.mxu0 %v875
        %1227 = vmatpush.bf16.msra.mxu0 %v873
        %1228 = vmatpush.bf16.msra.mxu0 %v871
        %1229 = vmatpush.bf16.msra.mxu0 %v869
        %1230 = vmatpush.bf16.msra.mxu0 %v867
        %1231 = vmatpush.bf16.msra.mxu0 %v865
        %1232 = vmatmul.bf16.gmra.mxu0 %v451
        %v1233 = vpop.f32.mrf.mxu0
        %v1234 = vadd.f32 %v477, %v1233
        %v1235 = vpop.f32.mrf.mxu0
        %1236 = vdwg.mxu0
        %1237 = vmatpush.bf16.msra.mxu0 %v895
        %1238 = vmatpush.bf16.msra.mxu0 %v893
        %1239 = vmatpush.bf16.msra.mxu0 %v891
        %1240 = vmatpush.bf16.msra.mxu0 %v889
        %1241 = vmatpush.bf16.msra.mxu0 %v887
        %1242 = vmatpush.bf16.msra.mxu0 %v885
        %1243 = vmatpush.bf16.msra.mxu0 %v883
        %1244 = vmatpush.bf16.msra.mxu0 %v881
        %1245 = vmatmul.bf16.gmra.mxu0 %v452
        %v1246 = vpop.f32.mrf.mxu0
        %v1247 = vadd.f32 %v1234, %v1246
        %v1248 = vpop.f32.mrf.mxu0
        %1249 = vdwg.mxu0
        %1250 = vmatpush.bf16.msra.mxu0 %v911
        %1251 = vmatpush.bf16.msra.mxu0 %v909
        %1252 = vmatpush.bf16.msra.mxu0 %v907
        %1253 = vmatpush.bf16.msra.mxu0 %v905
        %1254 = vmatpush.bf16.msra.mxu0 %v903
        %1255 = vmatpush.bf16.msra.mxu0 %v901
        %1256 = vmatpush.bf16.msra.mxu0 %v899
        %1257 = vmatpush.bf16.msra.mxu0 %v897
        %1258 = vmatmul.bf16.gmra.mxu0 %v453
        %v1259 = vpop.f32.mrf.mxu0
        %v1260 = vadd.f32 %v1247, %v1259
        %v1261 = vpop.f32.mrf.mxu0
        %1262 = vdwg.mxu0
        %1263 = vmatpush.bf16.msra.mxu0 %v927
        %1264 = vmatpush.bf16.msra.mxu0 %v925
        %1265 = vmatpush.bf16.msra.mxu0 %v923
        %1266 = vmatpush.bf16.msra.mxu0 %v921
        %1267 = vmatpush.bf16.msra.mxu0 %v919
        %1268 = vmatpush.bf16.msra.mxu0 %v917
        %1269 = vmatpush.bf16.msra.mxu0 %v915
        %1270 = vmatpush.bf16.msra.mxu0 %v913
        %1271 = vmatmul.bf16.gmra.mxu0 %v454
        %v1272 = vpop.f32.mrf.mxu0
        %v1273 = vadd.f32 %v1260, %v1272
        %v1274 = vpop.f32.mrf.mxu0
        %1275 = vdwg.mxu0
        %1276 = vmatpush.bf16.msra.mxu0 %v943
        %1277 = vmatpush.bf16.msra.mxu0 %v941
        %1278 = vmatpush.bf16.msra.mxu0 %v939
        %1279 = vmatpush.bf16.msra.mxu0 %v937
        %1280 = vmatpush.bf16.msra.mxu0 %v935
        %1281 = vmatpush.bf16.msra.mxu0 %v933
        %1282 = vmatpush.bf16.msra.mxu0 %v931
        %1283 = vmatpush.bf16.msra.mxu0 %v929
        %1284 = vmatmul.bf16.gmra.mxu0 %v455
        %v1285 = vpop.f32.mrf.mxu0
        %v1286 = vadd.f32 %v1273, %v1285
        %v1287 = vpop.f32.mrf.mxu0
        %1288 = vdwg.mxu0
        %1289 = vmatpush.bf16.msra.mxu0 %v959
        %1290 = vmatpush.bf16.msra.mxu0 %v957
        %1291 = vmatpush.bf16.msra.mxu0 %v955
        %1292 = vmatpush.bf16.msra.mxu0 %v953
        %1293 = vmatpush.bf16.msra.mxu0 %v951
        %1294 = vmatpush.bf16.msra.mxu0 %v949
        %1295 = vmatpush.bf16.msra.mxu0 %v947
        %1296 = vmatpush.bf16.msra.mxu0 %v945
        %1297 = vmatmul.bf16.gmra.mxu0 %v456
        %v1298 = vpop.f32.mrf.mxu0
        %v1299 = vadd.f32 %v1286, %v1298
        %v1300 = vpop.f32.mrf.mxu0
        %1301 = vdwg.mxu0
        %1302 = vmatpush.bf16.msra.mxu0 %v975
        %1303 = vmatpush.bf16.msra.mxu0 %v973
        %1304 = vmatpush.bf16.msra.mxu0 %v971
        %1305 = vmatpush.bf16.msra.mxu0 %v969
        %1306 = vmatpush.bf16.msra.mxu0 %v967
        %1307 = vmatpush.bf16.msra.mxu0 %v965
        %1308 = vmatpush.bf16.msra.mxu0 %v963
        %1309 = vmatpush.bf16.msra.mxu0 %v961
        %1310 = vmatmul.bf16.gmra.mxu0 %v457
        %v1311 = vpop.f32.mrf.mxu0
        %v1312 = vadd.f32 %v1299, %v1311
        %v1313 = vpop.f32.mrf.mxu0
        %1314 = vdwg.mxu0
        %1315 = vmatpush.bf16.msra.mxu0 %v991
        %1316 = vmatpush.bf16.msra.mxu0 %v989
        %1317 = vmatpush.bf16.msra.mxu0 %v987
        %1318 = vmatpush.bf16.msra.mxu0 %v985
        %1319 = vmatpush.bf16.msra.mxu0 %v983
        %1320 = vmatpush.bf16.msra.mxu0 %v981
        %1321 = vmatpush.bf16.msra.mxu0 %v979
        %1322 = vmatpush.bf16.msra.mxu0 %v977
        %1323 = vmatmul.bf16.gmra.mxu0 %v458
        %v1324 = vpop.f32.mrf.mxu0
        %v1325 = vadd.f32 %v1312, %v1324
        %v1326 = vpop.f32.mrf.mxu0
        %1327 = vdwg.mxu0
        %v1328 = vtanh.pop %v1221
        %v1329 = vtanh.pop %v1325
        %1330 = vst [vmem:[%s310] sm:$0xff] %v1328
        %1331 = vst [vmem:[%s310 + $0x8] sm:$0xff] %v1329
        %1332 = vmatpush.bf16.msra.mxu0 %v878
        %1333 = vmatpush.bf16.msra.mxu0 %v876
        %1334 = vmatpush.bf16.msra.mxu0 %v874
        %1335 = vmatpush.bf16.msra.mxu0 %v872
        %1336 = vmatpush.bf16.msra.mxu0 %v870
        %1337 = vmatpush.bf16.msra.mxu0 %v868
        %1338 = vmatpush.bf16.msra.mxu0 %v866
        %1339 = vmatpush.bf16.msra.mxu0 %v864
        %1340 = vmatmul.bf16.gmra.mxu0 %v467
        %v1341 = vpop.f32.mrf.mxu0
        %v1342 = vadd.f32 %v476, %v1341
        %v1343 = vpop.f32.mrf.mxu0
        %1344 = vdwg.mxu0
        %1345 = vmatpush.bf16.msra.mxu0 %v894
        %1346 = vmatpush.bf16.msra.mxu0 %v892
        %1347 = vmatpush.bf16.msra.mxu0 %v890
        %1348 = vmatpush.bf16.msra.mxu0 %v888
        %1349 = vmatpush.bf16.msra.mxu0 %v886
        %1350 = vmatpush.bf16.msra.mxu0 %v884
        %1351 = vmatpush.bf16.msra.mxu0 %v882
        %1352 = vmatpush.bf16.msra.mxu0 %v880
        %1353 = vmatmul.bf16.gmra.mxu0 %v468
        %v1354 = vpop.f32.mrf.mxu0
        %v1355 = vadd.f32 %v1342, %v1354
        %v1356 = vpop.f32.mrf.mxu0
        %1357 = vdwg.mxu0
        %1358 = vmatpush.bf16.msra.mxu0 %v910
        %1359 = vmatpush.bf16.msra.mxu0 %v908
        %1360 = vmatpush.bf16.msra.mxu0 %v906
        %1361 = vmatpush.bf16.msra.mxu0 %v904
        %1362 = vmatpush.bf16.msra.mxu0 %v902
        %1363 = vmatpush.bf16.msra.mxu0 %v900
        %1364 = vmatpush.bf16.msra.mxu0 %v898
        %1365 = vmatpush.bf16.msra.mxu0 %v896
        %1366 = vmatmul.bf16.gmra.mxu0 %v469
        %v1367 = vpop.f32.mrf.mxu0
        %v1368 = vadd.f32 %v1355, %v1367
        %v1369 = vpop.f32.mrf.mxu0
        %1370 = vdwg.mxu0
        %1371 = vmatpush.bf16.msra.mxu0 %v926
        %1372 = vmatpush.bf16.msra.mxu0 %v924
        %1373 = vmatpush.bf16.msra.mxu0 %v922
        %1374 = vmatpush.bf16.msra.mxu0 %v920
        %1375 = vmatpush.bf16.msra.mxu0 %v918
        %1376 = vmatpush.bf16.msra.mxu0 %v916
        %1377 = vmatpush.bf16.msra.mxu0 %v914
        %1378 = vmatpush.bf16.msra.mxu0 %v912
        %1379 = vmatmul.bf16.gmra.mxu0 %v470
        %v1380 = vpop.f32.mrf.mxu0
        %v1381 = vadd.f32 %v1368, %v1380
        %v1382 = vpop.f32.mrf.mxu0
        %1383 = vdwg.mxu0
        %1384 = vmatpush.bf16.msra.mxu0 %v942
        %1385 = vmatpush.bf16.msra.mxu0 %v940
        %1386 = vmatpush.bf16.msra.mxu0 %v938
        %1387 = vmatpush.bf16.msra.mxu0 %v936
        %1388 = vmatpush.bf16.msra.mxu0 %v934
        %1389 = vmatpush.bf16.msra.mxu0 %v932
        %1390 = vmatpush.bf16.msra.mxu0 %v930
        %1391 = vmatpush.bf16.msra.mxu0 %v928
        %1392 = vmatmul.bf16.gmra.mxu0 %v471
        %v1393 = vpop.f32.mrf.mxu0
        %v1394 = vadd.f32 %v1381, %v1393
        %v1395 = vpop.f32.mrf.mxu0
        %1396 = vdwg.mxu0
        %1397 = vmatpush.bf16.msra.mxu0 %v958
        %1398 = vmatpush.bf16.msra.mxu0 %v956
        %1399 = vmatpush.bf16.msra.mxu0 %v954
        %1400 = vmatpush.bf16.msra.mxu0 %v952
        %1401 = vmatpush.bf16.msra.mxu0 %v950
        %1402 = vmatpush.bf16.msra.mxu0 %v948
        %1403 = vmatpush.bf16.msra.mxu0 %v946
        %1404 = vmatpush.bf16.msra.mxu0 %v944
        %1405 = vmatmul.bf16.gmra.mxu0 %v472
        %v1406 = vpop.f32.mrf.mxu0
        %v1407 = vadd.f32 %v1394, %v1406
        %v1408 = vpop.f32.mrf.mxu0
        %1409 = vdwg.mxu0
        %1410 = vmatpush.bf16.msra.mxu0 %v974
        %1411 = vmatpush.bf16.msra.mxu0 %v972
        %1412 = vmatpush.bf16.msra.mxu0 %v970
        %1413 = vmatpush.bf16.msra.mxu0 %v968
        %1414 = vmatpush.bf16.msra.mxu0 %v966
        %1415 = vmatpush.bf16.msra.mxu0 %v964
        %1416 = vmatpush.bf16.msra.mxu0 %v962
        %1417 = vmatpush.bf16.msra.mxu0 %v960
        %1418 = vmatmul.bf16.gmra.mxu0 %v473
        %v1419 = vpop.f32.mrf.mxu0
        %v1420 = vadd.f32 %v1407, %v1419
        %v1421 = vpop.f32.mrf.mxu0
        %1422 = vdwg.mxu0
        %1423 = vmatpush.bf16.msra.mxu0 %v990
        %1424 = vmatpush.bf16.msra.mxu0 %v988
        %1425 = vmatpush.bf16.msra.mxu0 %v986
        %1426 = vmatpush.bf16.msra.mxu0 %v984
        %1427 = vmatpush.bf16.msra.mxu0 %v982
        %1428 = vmatpush.bf16.msra.mxu0 %v980
        %1429 = vmatpush.bf16.msra.mxu0 %v978
        %1430 = vmatpush.bf16.msra.mxu0 %v976
        %1431 = vmatmul.bf16.gmra.mxu0 %v474
        %v1432 = vpop.f32.mrf.mxu0
        %v1433 = vadd.f32 %v1420, %v1432
        %v1434 = vpop.f32.mrf.mxu0
        %1435 = vdwg.mxu0
        %1436 = vmatpush.bf16.msra.mxu0 %v879
        %1437 = vmatpush.bf16.msra.mxu0 %v877
        %1438 = vmatpush.bf16.msra.mxu0 %v875
        %1439 = vmatpush.bf16.msra.mxu0 %v873
        %1440 = vmatpush.bf16.msra.mxu0 %v871
        %1441 = vmatpush.bf16.msra.mxu0 %v869
        %1442 = vmatpush.bf16.msra.mxu0 %v867
        %1443 = vmatpush.bf16.msra.mxu0 %v865
        %1444 = vmatmul.bf16.gmra.mxu0 %v467
        %v1445 = vpop.f32.mrf.mxu0
        %v1446 = vadd.f32 %v477, %v1445
        %v1447 = vpop.f32.mrf.mxu0
        %1448 = vdwg.mxu0
        %1449 = vmatpush.bf16.msra.mxu0 %v895
        %1450 = vmatpush.bf16.msra.mxu0 %v893
        %1451 = vmatpush.bf16.msra.mxu0 %v891
        %1452 = vmatpush.bf16.msra.mxu0 %v889
        %1453 = vmatpush.bf16.msra.mxu0 %v887
        %1454 = vmatpush.bf16.msra.mxu0 %v885
        %1455 = vmatpush.bf16.msra.mxu0 %v883
        %1456 = vmatpush.bf16.msra.mxu0 %v881
        %1457 = vmatmul.bf16.gmra.mxu0 %v468
        %v1458 = vpop.f32.mrf.mxu0
        %v1459 = vadd.f32 %v1446, %v1458
        %v1460 = vpop.f32.mrf.mxu0
        %1461 = vdwg.mxu0
        %1462 = vmatpush.bf16.msra.mxu0 %v911
        %1463 = vmatpush.bf16.msra.mxu0 %v909
        %1464 = vmatpush.bf16.msra.mxu0 %v907
        %1465 = vmatpush.bf16.msra.mxu0 %v905
        %1466 = vmatpush.bf16.msra.mxu0 %v903
        %1467 = vmatpush.bf16.msra.mxu0 %v901
        %1468 = vmatpush.bf16.msra.mxu0 %v899
        %1469 = vmatpush.bf16.msra.mxu0 %v897
        %1470 = vmatmul.bf16.gmra.mxu0 %v469
        %v1471 = vpop.f32.mrf.mxu0
        %v1472 = vadd.f32 %v1459, %v1471
        %v1473 = vpop.f32.mrf.mxu0
        %1474 = vdwg.mxu0
        %1475 = vmatpush.bf16.msra.mxu0 %v927
        %1476 = vmatpush.bf16.msra.mxu0 %v925
        %1477 = vmatpush.bf16.msra.mxu0 %v923
        %1478 = vmatpush.bf16.msra.mxu0 %v921
        %1479 = vmatpush.bf16.msra.mxu0 %v919
        %1480 = vmatpush.bf16.msra.mxu0 %v917
        %1481 = vmatpush.bf16.msra.mxu0 %v915
        %1482 = vmatpush.bf16.msra.mxu0 %v913
        %1483 = vmatmul.bf16.gmra.mxu0 %v470
        %v1484 = vpop.f32.mrf.mxu0
        %v1485 = vadd.f32 %v1472, %v1484
        %v1486 = vpop.f32.mrf.mxu0
        %1487 = vdwg.mxu0
        %1488 = vmatpush.bf16.msra.mxu0 %v943
        %1489 = vmatpush.bf16.msra.mxu0 %v941
        %1490 = vmatpush.bf16.msra.mxu0 %v939
        %1491 = vmatpush.bf16.msra.mxu0 %v937
        %1492 = vmatpush.bf16.msra.mxu0 %v935
        %1493 = vmatpush.bf16.msra.mxu0 %v933
        %1494 = vmatpush.bf16.msra.mxu0 %v931
        %1495 = vmatpush.bf16.msra.mxu0 %v929
        %1496 = vmatmul.bf16.gmra.mxu0 %v471
        %v1497 = vpop.f32.mrf.mxu0
        %v1498 = vadd.f32 %v1485, %v1497
        %v1499 = vpop.f32.mrf.mxu0
        %1500 = vdwg.mxu0
        %1501 = vmatpush.bf16.msra.mxu0 %v959
        %1502 = vmatpush.bf16.msra.mxu0 %v957
        %1503 = vmatpush.bf16.msra.mxu0 %v955
        %1504 = vmatpush.bf16.msra.mxu0 %v953
        %1505 = vmatpush.bf16.msra.mxu0 %v951
        %1506 = vmatpush.bf16.msra.mxu0 %v949
        %1507 = vmatpush.bf16.msra.mxu0 %v947
        %1508 = vmatpush.bf16.msra.mxu0 %v945
        %1509 = vmatmul.bf16.gmra.mxu0 %v472
        %v1510 = vpop.f32.mrf.mxu0
        %v1511 = vadd.f32 %v1498, %v1510
        %v1512 = vpop.f32.mrf.mxu0
        %1513 = vdwg.mxu0
        %1514 = vmatpush.bf16.msra.mxu0 %v975
        %1515 = vmatpush.bf16.msra.mxu0 %v973
        %1516 = vmatpush.bf16.msra.mxu0 %v971
        %1517 = vmatpush.bf16.msra.mxu0 %v969
        %1518 = vmatpush.bf16.msra.mxu0 %v967
        %1519 = vmatpush.bf16.msra.mxu0 %v965
        %1520 = vmatpush.bf16.msra.mxu0 %v963
        %1521 = vmatpush.bf16.msra.mxu0 %v961
        %1522 = vmatmul.bf16.gmra.mxu0 %v473
        %v1523 = vpop.f32.mrf.mxu0
        %v1524 = vadd.f32 %v1511, %v1523
        %v1525 = vpop.f32.mrf.mxu0
        %1526 = vdwg.mxu0
        %1527 = vmatpush.bf16.msra.mxu0 %v991
        %1528 = vmatpush.bf16.msra.mxu0 %v989
        %1529 = vmatpush.bf16.msra.mxu0 %v987
        %1530 = vmatpush.bf16.msra.mxu0 %v985
        %1531 = vmatpush.bf16.msra.mxu0 %v983
        %1532 = vmatpush.bf16.msra.mxu0 %v981
        %1533 = vmatpush.bf16.msra.mxu0 %v979
        %1534 = vmatpush.bf16.msra.mxu0 %v977
        %1535 = vmatmul.bf16.gmra.mxu0 %v474
        %v1536 = vpop.f32.mrf.mxu0
        %v1537 = vadd.f32 %v1524, %v1536
        %v1538 = vpop.f32.mrf.mxu0
        %1539 = vdwg.mxu0
        %v1540 = vtanh.pop %v1433
        %v1541 = vtanh.pop %v1537
        %s1542 = scalar_lea.vmem %s310, 16 [#allocation9]
        %1543 = vst [vmem:[%s1542] sm:$0xff] %v1540
        %1544 = vst [vmem:[%s1542 + $0x8] sm:$0xff] %v1541
        %s1545 = sand.u32 %s146, 1
        %s1546 = scalar_lea.sflag [#allocation4], %s1545
        %s1547 = sand.u32 %s146, 1
        %s1548 = smul.addr %s1547, 32
        %s1549 = scalar_lea.vmem [#allocation9], %s1548
        // Predicated region
        $region53: #{tpu_custom_call.1} parent=35 // pred_check
          %p1550 = pneg %p156
        $region54: #{tpu_custom_call.1} parent=35 // pred_check_branch
          %1552 = sbr.rel (%p1550) target = $region56
        $region55: #{tpu_custom_call.1} parent=35 // pred_region
          %s1553 = smul.u32 2, %s25
          %1555 = vsyncadd %s1546, 0
          %s1556 = smul.addr %s24, 4
          %s1557 = sadd.s32 %s1553, %s1556
          %s1558 = smul.addr %s1557, 8
          %s1559 = scalar_lea.hbm %s4, %s1558
          %s1560 = sshll.u32 %s1549, 4
          %s1561 = int_to_ptr.vmem [resolvable:$true] %s1560
          %s1562 = sshll.u32 %s1559, 4
          %s1563 = int_to_ptr.hbm [resolvable:$true] %s1562
          %1568 = dma.vmem_to_hbm [thread:$0]  %s1561, 512, %s1563, %s1546, 256, 512, 16
        $region56: #{tpu_custom_call.1} parent=35 // pred_fallthru
          _
      $region36: #{tpu_custom_call.1} parent=5 // pred_fallthru
        _
      %p1569 = scmp.le.s32.totalorder 2, %s15
      // Predicated region
      $region57: #{tpu_custom_call.1} parent=5 // pred_check
        %p1570 = pneg %p1569
      $region58: #{tpu_custom_call.1} parent=5 // pred_check_branch
        %1572 = sbr.rel (%p1570) target = $region60
      $region59: #{tpu_custom_call.1} parent=5 // pred_region
        %s1573 = ssub.s32 %s15, 2
        // Predicated region
        $region61: #{tpu_custom_call.1} parent=59 // pred_check
          %p1574 = pneg %p162
        $region62: #{tpu_custom_call.1} parent=59 // pred_check_branch
          %1576 = sbr.rel (%p1574) target = $region64
        $region63: #{tpu_custom_call.1} parent=59 // pred_region
          %s1577 = sand.u32 %s147, 1
          %s1578 = scalar_lea.sflag [#allocation4], %s1577
          %s1579 = sand.u32 %s147, 1
          %s1580 = smul.addr %s1579, 32
          %s1581 = scalar_lea.vmem [#allocation9], %s1580
          %1583 = dma.done %s1578, 512
        $region64: #{tpu_custom_call.1} parent=59 // pred_fallthru
          _
      $region60: #{tpu_custom_call.1} parent=5 // pred_fallthru
        _
    $region6: #{tpu_custom_call.1} parent=1 // loop_footer
      %s19 = sadd.s32 1, %s15
    $region7: #{tpu_custom_call.1} parent=1 // loop_footer_branch
      %14 = sbr.rel target = $region3
    $region8: #{tpu_custom_call.1} parent=1 // loop_exit
      _
    %1584 = vsyncpa [#allocation3], 1
    %s1585 = scalar_lea.sflag [#allocation3], 1
    %1586 = vsyncpa %s1585, 1
    %1587 = vsyncpa [#allocation6], 1
    %1588 = vsyncpa [#allocation4], 1
    %s1589 = scalar_lea.sflag [#allocation4], 1
    %1590 = vsyncpa %s1589, 1

</llo_original>
